<compile_context>
chip_gen: v7x
topology: tpu7x:2x2x1
jax: 0.10.0
libtpu: 0.0.40
codegen_flags: <defaults>
</compile_context>

<pallas_src>
import functools

import jax
import jax.numpy as jnp
from jax.experimental import pallas as pl
from jax.experimental.pallas import tpu as pltpu


def _sepconv_kernel(xp_ref, wk_ref, o_ref, *, K, stride, Ho):
    """One batch element, fused-lane layout, K banded MXU matmuls.

    xp_ref : (Hp, Wp*Cin)          padded input row slab, (W, Cin) fused on lanes, bf16
    wk_ref : (K, Wp*Cin, Wo*Cout)  folded depthwise*pointwise banded weights, bf16
    o_ref  : (Ho, Wo*Cout)         lane-dense output slab (last dim multiple of 128)
    """
    acc = jnp.zeros(o_ref.shape, jnp.float32)
    for kh in range(K):
        # Ref-slice only the rows this tap needs (no full-block vreg load).
        # H-stride is a sublane-strided window; W-stride is folded into wk.
        row_win = pl.ds(kh, Ho) if stride == 1 else pl.ds(kh, Ho, stride)
        band = xp_ref[row_win, :]                       # (Ho, Wp*Cin) bf16
        acc = acc + jnp.dot(band, wk_ref[kh],           # MXU, f32 accumulate
                            preferred_element_type=jnp.float32)
    o_ref[...] = acc.astype(o_ref.dtype)


def prepare_separable_weights(dw_torch, pw_torch, *, stride, padding, W,
                              compute_dtype=jnp.bfloat16):
    """Fold depthwise (Cin,1,K,K) + pointwise (Cout,Cin,1,1) weights into K banded
    MXU matrices of shape (K, Wp*Cin, Wo*Cout). Call once per weight set."""
    Cin, _, K, _ = dw_torch.shape
    Cout = pw_torch.shape[0]
    Wp = W + 2 * padding
    Wo = (Wp - K) // stride + 1

    dw = dw_torch[:, 0, :, :].astype(jnp.float32)       # (Cin, K, K)
    pw = pw_torch[:, :, 0, 0].astype(jnp.float32)       # (Cout, Cin)

    # block[kh, kw, c, co] = dw[c, kh, kw] * pw[co, c]
    block = jnp.einsum('chw,oc->hwco', dw, pw)           # (K, K, Cin, Cout)
    # sel[kw, w_in, wo] = 1  iff  w_in == wo*stride + kw   (banded W selection)
    kw = jnp.arange(K)[:, None, None]
    w_in = jnp.arange(Wp)[None, :, None]
    wo = jnp.arange(Wo)[None, None, :]
    sel = (w_in == wo * stride + kw).astype(jnp.float32)  # (K, Wp, Wo)
    # Wk[kh, w_in, c, wo, co] = sum_kw sel[kw, w_in, wo] * block[kh, kw, c, co]
    wk = jnp.einsum('kxw,hkco->hxcwo', sel, block)        # (K, Wp, Cin, Wo, Cout)
    return wk.reshape(K, Wp * Cin, Wo * Cout).astype(compute_dtype)


@functools.partial(jax.jit, static_argnames=("stride", "padding"))
def separable_conv(x_nchw, wk, *, stride, padding):
    """x_nchw: (N, Cin, H, W) f32; wk: folded weights from prepare_separable_weights."""
    N, Cin, H, W = x_nchw.shape
    K = wk.shape[0]
    Hp, Wp = H + 2 * padding, W + 2 * padding
    Ho = (Hp - K) // stride + 1
    Wo = (Wp - K) // stride + 1
    Cout = wk.shape[-1] // Wo
    assert wk.shape == (K, Wp * Cin, Wo * Cout), wk.shape

    # Plain-JAX glue: NCHW -> padded lane-fused (W,Cin) slab, bf16 (halves DMA).
    x_nhwc = jnp.transpose(x_nchw, (0, 2, 3, 1))                        # (N,H,W,Cin)
    xp = jnp.pad(x_nhwc, ((0, 0), (padding, padding), (padding, padding), (0, 0)))
    xp = xp.reshape(N, Hp, Wp * Cin).astype(jnp.bfloat16)

    kernel = functools.partial(_sepconv_kernel, K=K, stride=stride, Ho=Ho)

    out_slab = pl.pallas_call(
        kernel,
        out_shape=jax.ShapeDtypeStruct((N, Ho, Wo * Cout), x_nchw.dtype),
        # Parallel batch axis: both v7x TensorCores get work; weights use a
        # constant index_map so they stay VMEM-resident across grid steps.
        grid=(N,),
        in_specs=[
            pl.BlockSpec((None, Hp, Wp * Cin), lambda n: (n, 0, 0)),
            pl.BlockSpec((K, Wp * Cin, Wo * Cout), lambda n: (0, 0, 0)),
        ],
        out_specs=pl.BlockSpec((None, Ho, Wo * Cout), lambda n: (n, 0, 0)),
        compiler_params=pltpu.CompilerParams(
            dimension_semantics=("parallel",),
            vmem_limit_bytes=32 * 1024 * 1024),
    )(xp, wk)

    out = out_slab.reshape(N, Ho, Wo, Cout)
    return jnp.transpose(out, (0, 3, 1, 2))                             # back to NCHW


def _reference(x_nchw, dw_torch, pw_torch, *, stride, padding):
    """Pure-JAX f32 reference matching nn.Conv2d semantics."""
    Cin = x_nchw.shape[1]
    dw_out = jax.lax.conv_general_dilated(
        x_nchw, dw_torch,
        window_strides=(stride, stride),
        padding=((padding, padding), (padding, padding)),
        dimension_numbers=("NCHW", "OIHW", "NCHW"),
        feature_group_count=Cin,
    )
    return jax.lax.conv_general_dilated(
        dw_out, pw_torch,
        window_strides=(1, 1),
        padding="VALID",
        dimension_numbers=("NCHW", "OIHW", "NCHW"),
    )


if __name__ == "__main__":
    # Module config: SeparableConv(C_in=4, C_out=8, kernel_size=3, stride=1, padding=1)
    C_in, C_out, kernel_size, stride, padding = 4, 8, 3, 1, 1
    N, H, W = 2, 16, 16

    key = jax.random.PRNGKey(0)
    kx, kd, kp = jax.random.split(key, 3)
    x = jax.random.normal(kx, (N, C_in, H, W), dtype=jnp.float32)
    # Deterministic parameters (shapes match nn.Conv2d weights, bias=False).
    dw_w = jax.random.normal(kd, (C_in, 1, kernel_size, kernel_size), dtype=jnp.float32) * 0.1
    pw_w = jax.random.normal(kp, (C_out, C_in, 1, 1), dtype=jnp.float32) * 0.1

    # Weight folding hoisted out of the per-call path (done once per weight set).
    wk = prepare_separable_weights(dw_w, pw_w, stride=stride, padding=padding, W=W)

    out = separable_conv(x, wk, stride=stride, padding=padding)
    out = jax.block_until_ready(out)

    ref = _reference(x, dw_w, pw_w, stride=stride, padding=padding)
    assert out.shape == ref.shape, (out.shape, ref.shape)
    # bf16 MXU operands with f32 accumulation -> relaxed tolerance.
    assert jnp.allclose(out, ref, atol=1e-2, rtol=1e-2), \
        f"mismatch vs reference conv, max abs err={float(jnp.max(jnp.abs(out - ref)))}"

    print("KERNEL_OK")
</pallas_src>

<mosaic_0001>
module attributes {stable_mosaic.version = 11 : i64} {
  func.func @_sepconv_kernel(%arg0: i32, %arg1: memref<1x18x72xbf16, #tpu.memory_space<vmem>>, %arg2: memref<3x72x128xbf16, #tpu.memory_space<vmem>>, %arg3: memref<1x16x128xf32, #tpu.memory_space<vmem>>) attributes {dimension_semantics = [#tpu.dimension_semantics<parallel>], iteration_bounds = array<i64: 2>, scalar_prefetch = 0 : i64, scratch_operands = 0 : i64, tpu.core_type = #tpu.core_type<tc>, window_params = [{transform_indices = @transform_0, window_bounds = array<i64: 1, 18, 72>}, {pipeline_mode = #tpu.pipeline_mode<synchronous>, transform_indices = @transform_1, window_bounds = array<i64: 3, 72, 128>}, {transform_indices = @transform_2, window_bounds = array<i64: 1, 16, 128>}]} {
    %cst = arith.constant 0.000000e+00 : f32
    %0 = vector.broadcast %cst : f32 to vector<16x128xf32>
    %c0 = arith.constant 0 : index
    %c0_0 = arith.constant 0 : index
    %c0_1 = arith.constant 0 : index
    %1 = vector.load %arg1[%c0, %c0_0, %c0_1] : memref<1x18x72xbf16, #tpu.memory_space<vmem>>, vector<1x16x72xbf16>
    %2 = vector.shape_cast %1 : vector<1x16x72xbf16> to vector<16x72xbf16>
    %c0_2 = arith.constant 0 : index
    %c0_3 = arith.constant 0 : index
    %c0_4 = arith.constant 0 : index
    %3 = vector.load %arg2[%c0_2, %c0_3, %c0_4] : memref<3x72x128xbf16, #tpu.memory_space<vmem>>, vector<1x72x128xbf16>
    %4 = vector.shape_cast %3 : vector<1x72x128xbf16> to vector<72x128xbf16>
    %cst_5 = arith.constant dense<0.000000e+00> : vector<16x128xf32>
    %5 = tpu.matmul %2, %4, %cst_5 {dimension_numbers = #tpu.dot_dimension_numbers<[1], [0], [0], [1], [0, 0, 1, 1], [], []>} : vector<16x72xbf16>, vector<72x128xbf16>, vector<16x128xf32> -> vector<16x128xf32>
    %6 = arith.addf %0, %5 : vector<16x128xf32>
    %c0_6 = arith.constant 0 : index
    %c1 = arith.constant 1 : index
    %c0_7 = arith.constant 0 : index
    %7 = vector.load %arg1[%c0_6, %c1, %c0_7] : memref<1x18x72xbf16, #tpu.memory_space<vmem>>, vector<1x16x72xbf16>
    %8 = vector.shape_cast %7 : vector<1x16x72xbf16> to vector<16x72xbf16>
    %c1_8 = arith.constant 1 : index
    %c0_9 = arith.constant 0 : index
    %c0_10 = arith.constant 0 : index
    %9 = vector.load %arg2[%c1_8, %c0_9, %c0_10] : memref<3x72x128xbf16, #tpu.memory_space<vmem>>, vector<1x72x128xbf16>
    %10 = vector.shape_cast %9 : vector<1x72x128xbf16> to vector<72x128xbf16>
    %cst_11 = arith.constant dense<0.000000e+00> : vector<16x128xf32>
    %11 = tpu.matmul %8, %10, %cst_11 {dimension_numbers = #tpu.dot_dimension_numbers<[1], [0], [0], [1], [0, 0, 1, 1], [], []>} : vector<16x72xbf16>, vector<72x128xbf16>, vector<16x128xf32> -> vector<16x128xf32>
    %12 = arith.addf %6, %11 : vector<16x128xf32>
    %c0_12 = arith.constant 0 : index
    %c2 = arith.constant 2 : index
    %c0_13 = arith.constant 0 : index
    %13 = vector.load %arg1[%c0_12, %c2, %c0_13] : memref<1x18x72xbf16, #tpu.memory_space<vmem>>, vector<1x16x72xbf16>
    %14 = vector.shape_cast %13 : vector<1x16x72xbf16> to vector<16x72xbf16>
    %c2_14 = arith.constant 2 : index
    %c0_15 = arith.constant 0 : index
    %c0_16 = arith.constant 0 : index
    %15 = vector.load %arg2[%c2_14, %c0_15, %c0_16] : memref<3x72x128xbf16, #tpu.memory_space<vmem>>, vector<1x72x128xbf16>
    %16 = vector.shape_cast %15 : vector<1x72x128xbf16> to vector<72x128xbf16>
    %cst_17 = arith.constant dense<0.000000e+00> : vector<16x128xf32>
    %17 = tpu.matmul %14, %16, %cst_17 {dimension_numbers = #tpu.dot_dimension_numbers<[1], [0], [0], [1], [0, 0, 1, 1], [], []>} : vector<16x72xbf16>, vector<72x128xbf16>, vector<16x128xf32> -> vector<16x128xf32>
    %18 = arith.addf %12, %17 : vector<16x128xf32>
    %c0_18 = arith.constant 0 : index
    %c0_19 = arith.constant 0 : index
    %c0_20 = arith.constant 0 : index
    %19 = vector.load %arg3[%c0_18, %c0_19, %c0_20] : memref<1x16x128xf32, #tpu.memory_space<vmem>>, vector<1x16x128xf32>
    %20 = vector.shape_cast %19 : vector<1x16x128xf32> to vector<16x128xf32>
    %21 = vector.shape_cast %18 : vector<16x128xf32> to vector<1x16x128xf32>
    tpu.vector_store %arg3[%c0_18, %c0_19, %c0_20], %21 {strides = array<i32>} : memref<1x16x128xf32, #tpu.memory_space<vmem>>, vector<1x16x128xf32>,
    return
  }
  func.func @transform_0(%arg0: i32) -> (i32, i32, i32) {
    %c0_i32 = arith.constant 0 : i32
    %c0_i32_0 = arith.constant 0 : i32
    %c0_i32_1 = arith.constant 0 : i32
    return %arg0, %c0_i32, %c0_i32_0 : i32, i32, i32
  }
  func.func @transform_1(%arg0: i32) -> (i32, i32, i32) {
    %c0_i32 = arith.constant 0 : i32
    %c0_i32_0 = arith.constant 0 : i32
    %c0_i32_1 = arith.constant 0 : i32
    %c0_i32_2 = arith.constant 0 : i32
    return %c0_i32, %c0_i32_0, %c0_i32_1 : i32, i32, i32
  }
  func.func @transform_2(%arg0: i32) -> (i32, i32, i32) {
    %c0_i32 = arith.constant 0 : i32
    %c0_i32_0 = arith.constant 0 : i32
    %c0_i32_1 = arith.constant 0 : i32
    return %arg0, %c0_i32, %c0_i32_0 : i32, i32, i32
  }
}

</mosaic_0001>

<llo_original>
// kernel: separable_conv.1
$region0: #{separable_conv.1}
  #allocation0 [shape = 'u32[]', space=smem, size = 0x4, offset = 0x4, fixed_abs, tag = 'smem constant byte address 0x4 - core index']
  #allocation1 [shape = 'u32[144,128]{1,0:T(1,128)}', space=vmem, size = 0x12000, scoped, tag = 'internal scratch']
  %s0 = inlined_call_operand.vmem [shape: bf16[2,18,72], index: 0, kind: input, shape index: {}]
  %s1 = inlined_call_operand.vmem [shape: bf16[3,72,128], index: 1, kind: input, shape index: {}]
  %s2 = inlined_call_operand.vmem [shape: f32[2,16,128], index: 2, kind: output, shape index: {}]
  %s3 = sld [smem:[#allocation0]]
  $region41: #{separable_conv.1} parent=0
    _
  %s5 = ssub.s32 1, %s3
  %s6 = scalar_select 0, %s5, %s3
  loop: start=0, step=1, limit=4
  $region2: #{separable_conv.1} parent=0 // loop_pre_header
    _
  $region3: #{separable_conv.1} parent=0 // loop_header
    %s8 = sphi 0, %s12
    %p9 = scmp.ge.s32.totalorder %s8, 4
    %s18 = sphi 0, %s20
    %s21 = sphi 0, %s18
    %s22 = sphi 0, %s21
    %s38 = sphi 0, %s22
    %s42 = sphi 0, %s42
    %s44 = sphi 0, %s42
    %s45 = sphi 0, %s44
    %s59 = sphi 0, %s45
    %s65 = sphi 0, %s67
    %s68 = sphi 0, %s65
    %s69 = sphi 0, %s68
    %s85 = sphi 0, %s69
  $region4: #{separable_conv.1} parent=0 // loop_header_branch
    %11 = sbr.rel (%p9) target = $region8
  $region5: #{separable_conv.1} parent=0 // loop_body
    %s13 = ssub.s32 %s8, 1
    %s14 = ssub.s32 %s8, 2
    %s15 = sadd.s32 %s8, 1
    %s16 = ssub.s32 %s8, %s15
    %p17 = scmp.eq.s32.totalorder %s16, 0
    %s19 = sadd.s32 %s18, 1
    %s20 = scalar_select %p17, %s18, %s19
    %p23 = pneg %p17
    %p24 = scmp.eq.s32.totalorder %s8, 1
    %p25 = por %p23, %p24
    %p26 = scmp.ne.s32.totalorder %s18, %s21
    %p27 = scmp.eq.s32.totalorder %s8, 0
    %p28 = por %p26, %p27
    %p29 = scmp.ne.s32.totalorder %s18, %s21
    %p30 = scmp.eq.s32.totalorder %s13, 1
    %p31 = por %p29, %p30
    %p32 = scmp.ne.s32.totalorder %s21, %s22
    %p33 = scmp.eq.s32.totalorder %s13, 0
    %p34 = por %p32, %p33
    %p35 = scmp.ne.s32.totalorder %s21, %s22
    %p36 = scmp.eq.s32.totalorder %s14, 1
    %p37 = por %p35, %p36
    %p39 = scmp.ne.s32.totalorder %s22, %s38
    %p40 = scmp.eq.s32.totalorder %s14, 0
    %p41 = por %p39, %p40
    %s43 = sadd.s32 %s42, 1
    %p46 = scmp.eq.s32.totalorder %s8, 1
    %p47 = scmp.ne.s32.totalorder %s42, %s44
    %p48 = scmp.eq.s32.totalorder %s8, 0
    %p49 = por %p47, %p48
    %p50 = scmp.ne.s32.totalorder %s42, %s44
    %p51 = scmp.eq.s32.totalorder %s13, 1
    %p52 = por %p50, %p51
    %p53 = scmp.ne.s32.totalorder %s44, %s45
    %p54 = scmp.eq.s32.totalorder %s13, 0
    %p55 = por %p53, %p54
    %p56 = scmp.ne.s32.totalorder %s44, %s45
    %p57 = scmp.eq.s32.totalorder %s14, 1
    %p58 = por %p56, %p57
    %p60 = scmp.ne.s32.totalorder %s45, %s59
    %p61 = scmp.eq.s32.totalorder %s14, 0
    %p62 = por %p60, %p61
    %s63 = ssub.s32 %s8, %s15
    %p64 = scmp.eq.s32.totalorder %s63, 0
    %s66 = sadd.s32 %s65, 1
    %s67 = scalar_select %p64, %s65, %s66
    %p70 = pneg %p64
    %p71 = scmp.eq.s32.totalorder %s8, 1
    %p72 = por %p70, %p71
    %p73 = scmp.ne.s32.totalorder %s65, %s68
    %p74 = scmp.eq.s32.totalorder %s8, 0
    %p75 = por %p73, %p74
    %p76 = scmp.ne.s32.totalorder %s65, %s68
    %p77 = scmp.eq.s32.totalorder %s13, 1
    %p78 = por %p76, %p77
    %p79 = scmp.ne.s32.totalorder %s68, %s69
    %p80 = scmp.eq.s32.totalorder %s13, 0
    %p81 = por %p79, %p80
    %p82 = scmp.ne.s32.totalorder %s68, %s69
    %p83 = scmp.eq.s32.totalorder %s14, 1
    %p84 = por %p82, %p83
    %p86 = scmp.ne.s32.totalorder %s69, %s85
    %p87 = scmp.eq.s32.totalorder %s14, 0
    %p88 = por %p86, %p87
    %p89 = scmp.le.s32.totalorder 1, %s8
    %p90 = scmp.lt.s32.totalorder %s8, 3
    %p91 = pnand %p89, %p90
    %p92 = pneg %p91
    // Predicated region
    $region9: #{separable_conv.1} parent=5 // pred_check
      _
    $region10: #{separable_conv.1} parent=5 // pred_check_branch
      %94 = sbr.rel (%p91) target = $region12
    $region11: #{separable_conv.1} parent=5 // pred_region
      %s95 = ssub.s32 %s8, 1
      // Predicated region
      $region13: #{separable_conv.1} parent=11 // pred_check
        %p96 = pneg %p55
      $region14: #{separable_conv.1} parent=11 // pred_check_branch
        %98 = sbr.rel (%p96) target = $region16
      $region15: #{separable_conv.1} parent=11 // pred_region
        _
      $region16: #{separable_conv.1} parent=11 // pred_fallthru
        _
    $region12: #{separable_conv.1} parent=5 // pred_fallthru
      _
    %p99 = scmp.lt.s32.totalorder %s8, 2
    // Predicated region
    $region17: #{separable_conv.1} parent=5 // pred_check
      %p100 = pneg %p99
    $region18: #{separable_conv.1} parent=5 // pred_check_branch
      %102 = sbr.rel (%p100) target = $region20
    $region19: #{separable_conv.1} parent=5 // pred_region
      // Predicated region
      $region21: #{separable_conv.1} parent=19 // pred_check
        %p103 = pneg %p28
      $region22: #{separable_conv.1} parent=19 // pred_check_branch
        %105 = sbr.rel (%p103) target = $region24
      $region23: #{separable_conv.1} parent=19 // pred_region
        %p106 = scmp.lt.s32.totalorder %s8, 1
        %s107 = scalar_select %p106, %s8, 1
        %s108 = smul.addr %s107, 3
        %s109 = smul.addr %s108, 4
        %s110 = scalar_lea.vmem %s0, %s109
      $region24: #{separable_conv.1} parent=19 // pred_fallthru
        _
    $region20: #{separable_conv.1} parent=5 // pred_fallthru
      _
    %p111 = scmp.le.s32.totalorder 1, %s8
    %p112 = scmp.lt.s32.totalorder %s8, 3
    %p113 = pnand %p111, %p112
    %p114 = pneg %p113
    // Predicated region
    $region25: #{separable_conv.1} parent=5 // pred_check
      _
    $region26: #{separable_conv.1} parent=5 // pred_check_branch
      %116 = sbr.rel (%p113) target = $region28
    $region27: #{separable_conv.1} parent=5 // pred_region
      %s117 = ssub.s32 %s8, 1
      %p118 = scmp.lt.s32.totalorder %s13, 1
      %s119 = scalar_select %p118, %s13, 1
      %s120 = smul.addr %s119, 3
      %s121 = smul.addr %s120, 4
      %s122 = scalar_lea.vmem %s0, %s121
      %p123 = pneg %p34
      %p124 = pneg %p31
      %p125 = pneg %p55
      %p126 = pneg %p52
      %p127 = pneg %p81
      %p128 = pneg %p78
      %p129 = scmp.lt.s32.totalorder %s13, 1
      %s130 = scalar_select %p129, %s13, 1
      %s131 = smul.addr %s130, 2
      %s132 = smul.addr %s131, 8
      %s133 = scalar_lea.vmem %s2, %s132
      %p134 = scmp.lt.s32.totalorder %s13, 1
      %s135 = scalar_select %p134, %s13, 1
      %s136 = smul.addr %s135, 3
      %s137 = smul.addr %s136, 4
      %s138 = scalar_lea.vmem %s0, %s137
      %p139 = scmp.lt.s32.totalorder %s13, 1
      %s140 = scalar_select %p139, %s13, 1
      %s141 = smul.addr %s140, 2
      %s142 = smul.addr %s141, 8
      %s143 = scalar_lea.vmem %s2, %s142
      %v145 = vld [vmem:[%s138] sm:$0xf]
      %v146 = vld [vmem:[%s138 + $0x4] sm:$0xf]
      %v147 = vld [vmem:[%s1] sm:$0xf]
      %v148 = vld [vmem:[%s1 + $0x4] sm:$0xf]
      %v149 = vld [vmem:[%s1 + $0x8] sm:$0xf]
      %v150 = vld [vmem:[%s1 + $0xc] sm:$0xf]
      %v151 = vld [vmem:[%s1 + $0x10] sm:$0xf]
      %v152 = vld [vmem:[%s1 + $0x14] sm:$0xf]
      %v153 = vld [vmem:[%s1 + $0x18] sm:$0xf]
      %v154 = vld [vmem:[%s1 + $0x1c] sm:$0xf]
      %v155 = vld [vmem:[%s1 + $0x20] sm:$0xf]
      %v156 = vld [vmem:[%s138 + $0x8] sm:$0x1]
      %s157 = scalar_lea.vmem %s1, 36
      %v158 = vld [vmem:[%s157] sm:$0xf]
      %v159 = vld [vmem:[%s157 + $0x4] sm:$0xf]
      %v160 = vld [vmem:[%s157 + $0x8] sm:$0xf]
      %v161 = vld [vmem:[%s157 + $0xc] sm:$0xf]
      %v162 = vld [vmem:[%s157 + $0x10] sm:$0xf]
      %v163 = vld [vmem:[%s157 + $0x14] sm:$0xf]
      %v164 = vld [vmem:[%s157 + $0x18] sm:$0xf]
      %v165 = vld [vmem:[%s157 + $0x1c] sm:$0xf]
      %v166 = vld [vmem:[%s157 + $0x20] sm:$0xf]
      %v170 = vunpack.c.l.b16 %v145
      %v171 = vunpack.c.l.b16 %v146
      %v172 = vunpack.c.l.b16 %v156
      %v173 = vpack.c.b16 %v171, %v170
      %v174 = vpack.c.b16 %v172, %v172
      %vm175 = vsmask.f32 7424
      %v177 = vshrl.u32 %v173, 16
      %v179 = vshll.u32 %v173, 16
      %v181 = vrot.slane %v179, 1
      %v182 = vor.u32 %v177, %v181
      %v184 = vshll.u32 %v174, 16
      %v186 = vrot.slane %v184, 1
      %v187 = vsel %vm175, %v182, %v186
      %v197 = vunpack.c.l.b16 %v158
      %v198 = vunpack.c.l.b16 %v159
      %v199 = vunpack.c.l.b16 %v160
      %v200 = vunpack.c.l.b16 %v161
      %v201 = vunpack.c.l.b16 %v162
      %v202 = vunpack.c.l.b16 %v163
      %v203 = vunpack.c.l.b16 %v164
      %v204 = vunpack.c.l.b16 %v165
      %v205 = vunpack.c.l.b16 %v166
      %v206 = vpack.c.b16 %v198, %v197
      %v207 = vpack.c.b16 %v200, %v199
      %v208 = vpack.c.b16 %v202, %v201
      %v209 = vpack.c.b16 %v204, %v203
      %v210 = vpack.c.b16 %v205, %v205
      %vm215 = vcmask 588800
      %v217 = vsel %vm215, %v187, 0
      %vm219 = vcmask 1043456
      %v221 = vsel %vm219, %v210, 0
      %223 = vmatprep.subr.bf16.mxu0 0
      %224 = vmatpush1.bf16.msra.mxu0 %v206
      %225 = vmatprep.subr.bf16.mxu0 0
      %226 = vmatpush1.bf16.msra.mxu0 %v207
      %227 = vmatprep.subr.bf16.mxu0 0
      %228 = vmatpush1.bf16.msra.mxu0 %v208
      %229 = vmatprep.subr.bf16.mxu0 0
      %230 = vmatpush1.bf16.msra.mxu0 %v209
      %231 = vmatprep.subr.bf16.mxu0 0
      %232 = vmatpush1.bf16.msra.mxu0 %v221
      %233 = vmatprep.subr.bf16.mxu0 0
      %234 = vmatpush1.bf16.msra.mxu0 0
      %235 = vmatprep.subr.bf16.mxu0 0
      %236 = vmatpush1.bf16.msra.mxu0 0
      %237 = vmatprep.subr.bf16.mxu0 0
      %238 = vmatpush1.bf16.msra.mxu0 0
      %239 = vmatprep.subr.bf16.mxu0 0
      %240 = vmatpush1.bf16.msra.mxu0 0
      %241 = vmatprep.subr.bf16.mxu0 0
      %242 = vmatpush1.bf16.msra.mxu0 0
      %243 = vmatprep.subr.bf16.mxu0 0
      %244 = vmatpush1.bf16.msra.mxu0 0
      %245 = vmatprep.subr.bf16.mxu0 0
      %246 = vmatpush1.bf16.msra.mxu0 0
      %247 = vmatprep.subr.bf16.mxu0 0
      %248 = vmatpush1.bf16.msra.mxu0 0
      %249 = vmatprep.subr.bf16.mxu0 0
      %250 = vmatpush1.bf16.msra.mxu0 0
      %251 = vmatprep.subr.bf16.mxu0 0
      %252 = vmatpush1.bf16.msra.mxu0 0
      %253 = vmatprep.subr.bf16.mxu0 0
      %254 = vmatpush1.bf16.msra.mxu0 0
      %255 = vmatprep.mubr.bf16.mxu0 0
      %256 = vmatmul.mubr.bf16.gmra.mrb[0].mxu0 %v217
      %v257 = vpop.f32.mrb[0].mxu0
      %v258 = vadd.f32 0.0, %v257
      %v259 = vpop.f32.mrb[0].mxu0
      %v260 = vpop.f32.mrb[0].mxu0
      %v261 = vadd.f32 0.0, %v260
      %v262 = vpop.f32.mrb[0].mxu0
      %263 = vdwg.mxu0
      %v273 = vunpack.c.l.b16 %v147
      %v274 = vunpack.c.l.b16 %v148
      %v275 = vunpack.c.l.b16 %v149
      %v276 = vunpack.c.l.b16 %v150
      %v277 = vunpack.c.l.b16 %v151
      %v278 = vunpack.c.l.b16 %v152
      %v279 = vunpack.c.l.b16 %v153
      %v280 = vunpack.c.l.b16 %v154
      %v281 = vunpack.c.l.b16 %v155
      %v282 = vpack.c.b16 %v274, %v273
      %v283 = vpack.c.b16 %v276, %v275
      %v284 = vpack.c.b16 %v278, %v277
      %v285 = vpack.c.b16 %v280, %v279
      %v286 = vpack.c.b16 %v281, %v281
      %v291 = vsel %vm215, %v173, 0
      %v294 = vsel %vm219, %v286, 0
      %296 = vmatprep.subr.bf16.mxu0 0
      %297 = vmatpush1.bf16.msra.mxu0 %v282
      %298 = vmatprep.subr.bf16.mxu0 0
      %299 = vmatpush1.bf16.msra.mxu0 %v283
      %300 = vmatprep.subr.bf16.mxu0 0
      %301 = vmatpush1.bf16.msra.mxu0 %v284
      %302 = vmatprep.subr.bf16.mxu0 0
      %303 = vmatpush1.bf16.msra.mxu0 %v285
      %304 = vmatprep.subr.bf16.mxu0 0
      %305 = vmatpush1.bf16.msra.mxu0 %v294
      %306 = vmatprep.subr.bf16.mxu0 0
      %307 = vmatpush1.bf16.msra.mxu0 0
      %308 = vmatprep.subr.bf16.mxu0 0
      %309 = vmatpush1.bf16.msra.mxu0 0
      %310 = vmatprep.subr.bf16.mxu0 0
      %311 = vmatpush1.bf16.msra.mxu0 0
      %312 = vmatprep.subr.bf16.mxu0 0
      %313 = vmatpush1.bf16.msra.mxu0 0
      %314 = vmatprep.subr.bf16.mxu0 0
      %315 = vmatpush1.bf16.msra.mxu0 0
      %316 = vmatprep.subr.bf16.mxu0 0
      %317 = vmatpush1.bf16.msra.mxu0 0
      %318 = vmatprep.subr.bf16.mxu0 0
      %319 = vmatpush1.bf16.msra.mxu0 0
      %320 = vmatprep.subr.bf16.mxu0 0
      %321 = vmatpush1.bf16.msra.mxu0 0
      %322 = vmatprep.subr.bf16.mxu0 0
      %323 = vmatpush1.bf16.msra.mxu0 0
      %324 = vmatprep.subr.bf16.mxu0 0
      %325 = vmatpush1.bf16.msra.mxu0 0
      %326 = vmatprep.subr.bf16.mxu0 0
      %327 = vmatpush1.bf16.msra.mxu0 0
      %328 = vmatprep.mubr.bf16.mxu0 0
      %329 = vmatmul.mubr.bf16.gmra.mrb[0].mxu0 %v291
      %v330 = vpop.f32.mrb[0].mxu0
      %v331 = vadd.f32 %v258, %v330
      %v332 = vpop.f32.mrb[0].mxu0
      %v333 = vpop.f32.mrb[0].mxu0
      %v334 = vadd.f32 %v261, %v333
      %v335 = vpop.f32.mrb[0].mxu0
      %336 = vdwg.mxu0
      %v337 = vld [vmem:[%s138] sm:$0xe]
      %s338 = scalar_lea.vmem %s1, 72
      %v339 = vld [vmem:[%s338] sm:$0xf]
      %v340 = vld [vmem:[%s338 + $0x4] sm:$0xf]
      %v341 = vld [vmem:[%s338 + $0x8] sm:$0xf]
      %v342 = vld [vmem:[%s338 + $0xc] sm:$0xf]
      %v343 = vld [vmem:[%s338 + $0x10] sm:$0xf]
      %v344 = vld [vmem:[%s338 + $0x14] sm:$0xf]
      %v345 = vld [vmem:[%s338 + $0x18] sm:$0xf]
      %v346 = vld [vmem:[%s338 + $0x1c] sm:$0xf]
      %v347 = vld [vmem:[%s338 + $0x20] sm:$0xf]
      %v349 = vunpack.c.l.b16 %v337
      %v350 = vpack.c.b16 %v171, %v349
      %vm351 = vcmask 1046528
      %v352 = vrot.slane %v350, 1
      %v353 = vrot.slane %v174, 1
      %v354 = vsel %vm351, %v352, %v353
      %v364 = vunpack.c.l.b16 %v339
      %v365 = vunpack.c.l.b16 %v340
      %v366 = vunpack.c.l.b16 %v341
      %v367 = vunpack.c.l.b16 %v342
      %v368 = vunpack.c.l.b16 %v343
      %v369 = vunpack.c.l.b16 %v344
      %v370 = vunpack.c.l.b16 %v345
      %v371 = vunpack.c.l.b16 %v346
      %v372 = vunpack.c.l.b16 %v347
      %v373 = vpack.c.b16 %v365, %v364
      %v374 = vpack.c.b16 %v367, %v366
      %v375 = vpack.c.b16 %v369, %v368
      %v376 = vpack.c.b16 %v371, %v370
      %v377 = vpack.c.b16 %v372, %v372
      %v383 = vsel %vm215, %v354, 0
      %v386 = vsel %vm219, %v377, 0
      %388 = vmatprep.subr.bf16.mxu0 0
      %389 = vmatpush1.bf16.msra.mxu0 %v373
      %390 = vmatprep.subr.bf16.mxu0 0
      %391 = vmatpush1.bf16.msra.mxu0 %v374
      %392 = vmatprep.subr.bf16.mxu0 0
      %393 = vmatpush1.bf16.msra.mxu0 %v375
      %394 = vmatprep.subr.bf16.mxu0 0
      %395 = vmatpush1.bf16.msra.mxu0 %v376
      %396 = vmatprep.subr.bf16.mxu0 0
      %397 = vmatpush1.bf16.msra.mxu0 %v386
      %398 = vmatprep.subr.bf16.mxu0 0
      %399 = vmatpush1.bf16.msra.mxu0 0
      %400 = vmatprep.subr.bf16.mxu0 0
      %401 = vmatpush1.bf16.msra.mxu0 0
      %402 = vmatprep.subr.bf16.mxu0 0
      %403 = vmatpush1.bf16.msra.mxu0 0
      %404 = vmatprep.subr.bf16.mxu0 0
      %405 = vmatpush1.bf16.msra.mxu0 0
      %406 = vmatprep.subr.bf16.mxu0 0
      %407 = vmatpush1.bf16.msra.mxu0 0
      %408 = vmatprep.subr.bf16.mxu0 0
      %409 = vmatpush1.bf16.msra.mxu0 0
      %410 = vmatprep.subr.bf16.mxu0 0
      %411 = vmatpush1.bf16.msra.mxu0 0
      %412 = vmatprep.subr.bf16.mxu0 0
      %413 = vmatpush1.bf16.msra.mxu0 0
      %414 = vmatprep.subr.bf16.mxu0 0
      %415 = vmatpush1.bf16.msra.mxu0 0
      %416 = vmatprep.subr.bf16.mxu0 0
      %417 = vmatpush1.bf16.msra.mxu0 0
      %418 = vmatprep.subr.bf16.mxu0 0
      %419 = vmatpush1.bf16.msra.mxu0 0
      %420 = vmatprep.mubr.bf16.mxu0 0
      %421 = vmatmul.mubr.bf16.gmra.mrb[0].mxu0 %v383
      %v422 = vpop.f32.mrb[0].mxu0
      %v423 = vadd.f32 0.0, %v422
      %v424 = vpop.f32.mrb[0].mxu0
      %v425 = vpop.f32.mrb[0].mxu0
      %v426 = vadd.f32 0.0, %v425
      %v427 = vpop.f32.mrb[0].mxu0
      %428 = vdwg.mxu0
      %v429 = vadd.f32 %v331, %v423
      %v430 = vadd.f32 %v334, %v426
      %431 = vst [vmem:[%s143] sm:$0xff] %v429
      %432 = vst [vmem:[%s143 + $0x8] sm:$0xff] %v430
      %p433 = scmp.lt.s32.totalorder %s13, 1
      %s434 = scalar_select %p433, %s13, 1
      %s435 = smul.addr %s434, 2
      %s436 = smul.addr %s435, 8
      %s437 = scalar_lea.vmem %s2, %s436
      // Predicated region
      $region29: #{separable_conv.1} parent=27 // pred_check
        %p438 = pneg %p78
      $region30: #{separable_conv.1} parent=27 // pred_check_branch
        %440 = sbr.rel (%p438) target = $region32
      $region31: #{separable_conv.1} parent=27 // pred_region
        _
      $region32: #{separable_conv.1} parent=27 // pred_fallthru
        _
    $region28: #{separable_conv.1} parent=5 // pred_fallthru
      _
    %p441 = scmp.le.s32.totalorder 2, %s8
    // Predicated region
    $region33: #{separable_conv.1} parent=5 // pred_check
      %p442 = pneg %p441
    $region34: #{separable_conv.1} parent=5 // pred_check_branch
      %444 = sbr.rel (%p442) target = $region36
    $region35: #{separable_conv.1} parent=5 // pred_region
      %s445 = ssub.s32 %s8, 2
      // Predicated region
      $region37: #{separable_conv.1} parent=35 // pred_check
        %p446 = pneg %p84
      $region38: #{separable_conv.1} parent=35 // pred_check_branch
        %448 = sbr.rel (%p446) target = $region40
      $region39: #{separable_conv.1} parent=35 // pred_region
        %p449 = scmp.lt.s32.totalorder %s14, 1
        %s450 = scalar_select %p449, %s14, 1
        %s451 = smul.addr %s450, 2
        %s452 = smul.addr %s451, 8
        %s453 = scalar_lea.vmem %s2, %s452
      $region40: #{separable_conv.1} parent=35 // pred_fallthru
        _
    $region36: #{separable_conv.1} parent=5 // pred_fallthru
      _
  $region6: #{separable_conv.1} parent=0 // loop_footer
    %s12 = sadd.s32 1, %s8
  $region7: #{separable_conv.1} parent=0 // loop_footer_branch
    %7 = sbr.rel target = $region3
  $region8: #{separable_conv.1} parent=0 // loop_exit
    _

</llo_original>
